<compile_context>
chip_gen: v7x
topology: tpu7x:2x2x1
jax: 0.10.0
libtpu: 0.0.40
codegen_flags: <defaults>
</compile_context>

<pallas_src>
import functools

import jax
import jax.numpy as jnp
from jax.experimental import pallas as pl
from jax.experimental.pallas import tpu as pltpu


def _round_up(x, m):
    return (x + m - 1) // m * m


def _default_square_in_f32():
    # v6e / v7x have a bf16-capable VPU; older gens square via f32.
    try:
        kind = jax.devices()[0].device_kind.lower()
    except Exception:
        return True
    return not any(tag in kind for tag in ("v6", "v7", "7x"))


def fm_kernel(w0_ref, x_ref, wext_ref, v_ref, out_ref, *, e, square_in_f32):
    # w0_ref:   SMEM (1,) f32 global bias
    # x_ref:    (TB, Fp)   compute dtype (bf16 or f32) batch tile of features
    # wext_ref: (Fp, E+1)  compute dtype, [w2 | w1] packed weights (resident)
    # v_ref:    (Fp, 1)    compute dtype, rowsum(w2*w2) (resident)
    # out_ref:  (TB, 1)    f32 sigmoid outputs
    x = x_ref[...]

    # One fused MXU pass gives both x@w2 (cols :e) and x@w1 (col e).
    u = jnp.dot(x, wext_ref[...], preferred_element_type=jnp.float32)  # (TB, E+1)
    xw2 = u[:, :e]                                                     # (TB, E)
    first_order = w0_ref[0] + u[:, e:e + 1]                            # (TB, 1)

    if square_in_f32:
        # v5e-and-older path: VPU has no bf16 multiply.
        xf = x.astype(jnp.float32)
        x_sq = (xf * xf).astype(x.dtype)
    else:
        # v6e/v7x: bf16 square on the VPU, no f32 temp.
        x_sq = x * x

    # sum_e((x^2)@(w2^2)) == (x^2) @ rowsum(w2^2)   -> single N=1 matmul.
    s2 = jnp.dot(x_sq, v_ref[...], preferred_element_type=jnp.float32)  # (TB, 1)

    second_order = 0.5 * (jnp.sum(xw2 * xw2, axis=1, keepdims=True) - s2)
    out_ref[...] = jax.nn.sigmoid(first_order + second_order)


def fm_forward(x_feat, w0, w1, w2, *, compute_dtype=jnp.bfloat16, block_b=2048,
               square_in_f32=None):
    """x_feat: (B, F or F_pad) concatenated features (sparse embeds then dense)."""
    B = x_feat.shape[0]
    F = w2.shape[0]
    E = w2.shape[1]
    f_pad = _round_up(max(F, x_feat.shape[1]), 128)

    if square_in_f32 is None:
        square_in_f32 = _default_square_in_f32()

    # Fold w1 into w2 (single MXU pass) and collapse w2*w2 to its row-sum.
    w_ext = jnp.concatenate([w2, w1], axis=1)            # (F, E+1) f32
    v = jnp.sum(w2 * w2, axis=1, keepdims=True)          # (F, 1)   f32

    # --- tile sizing: biggest batch tile that fits the VMEM budget ----------
    itemsize = jnp.dtype(compute_dtype).itemsize
    vmem_budget = 16 * 1024 * 1024                       # double-buffered x tile
    tb_cap = max(16, (vmem_budget // (2 * f_pad * itemsize)) // 16 * 16)
    tb = min(block_b, tb_cap)
    tb = max(16, min(tb, _round_up(B, 16)))              # don't exceed padded batch
    tb = _round_up(tb, 16)                               # bf16 sublane packing
    b_pad = _round_up(B, tb)
    num_tiles = b_pad // tb
    # NOTE: not forcing num_tiles even for v7x megacore -- it doesn't shorten
    # the critical path (ceil(n/2) steps per core either way).

    # --- pad / cast inputs (no-ops if the wrapper already pre-padded) -------
    x_p = x_feat.astype(compute_dtype)
    if x_p.shape[1] < f_pad:
        x_p = jnp.pad(x_p, ((0, 0), (0, f_pad - x_p.shape[1])))
    if b_pad > B:
        x_p = jnp.concatenate(
            [x_p, jnp.zeros((b_pad - B, f_pad), compute_dtype)], axis=0)

    wext_p = jnp.pad(w_ext, ((0, f_pad - F), (0, 0))).astype(compute_dtype)
    v_p = jnp.pad(v, ((0, f_pad - F), (0, 0))).astype(compute_dtype)
    w0 = w0.astype(jnp.float32).reshape((1,))

    kernel = functools.partial(fm_kernel, e=E, square_in_f32=square_in_f32)

    out = pl.pallas_call(
        kernel,
        out_shape=jax.ShapeDtypeStruct((b_pad, 1), jnp.float32),
        grid=(num_tiles,),
        in_specs=[
            pl.BlockSpec(memory_space=pltpu.MemorySpace.SMEM),   # w0 scalar
            pl.BlockSpec((tb, f_pad), lambda i: (i, 0)),         # x batch tile
            pl.BlockSpec((f_pad, E + 1), lambda i: (0, 0)),      # [w2|w1] resident
            pl.BlockSpec((f_pad, 1), lambda i: (0, 0)),          # rowsum(w2^2)
        ],
        out_specs=pl.BlockSpec((tb, 1), lambda i: (i, 0)),
        compiler_params=pltpu.CompilerParams(
            # Megacore: batch tiles are independent -> split across 2 TCs (v7x).
            dimension_semantics=("parallel",),
            # Safe on v5e/v6e (128 MiB) and v7x (64 MiB); actual use <= ~16 MiB.
            vmem_limit_bytes=32 * 1024 * 1024,
        ),
    )(w0, x_p, wext_p, v_p)
    return out[:B, 0]  # drop batch padding; .view(B) in torch


def fm_apply(params, x, *, compute_dtype=jnp.bfloat16, block_b=2048,
             square_in_f32=None):
    """Full module forward: x is (B, n_dense + n_sparse) raw input like torch."""
    n_dense = params["n_dense"]
    dense_inputs = x[:, :n_dense]                        # (B, n_dense)
    sparse_inputs = x[:, n_dense:].astype(jnp.int32)     # (B, n_sparse)

    # TODO(synk): fuse this gather + concat into the kernel via
    # PrefetchScalarGridSpec (indices in SMEM, tables resident in VMEM) to kill
    # the HBM round trip of x_feat.  Until then, build the intermediate
    # directly in the compute dtype and pre-padded to the 128-lane width so the
    # wrapper does a single fused concat pass (no f32 copy, no extra pad pass).
    parts = [
        jnp.take(params["embed"][i], sparse_inputs[:, i], axis=0).astype(compute_dtype)
        for i in range(sparse_inputs.shape[1])
    ] + [dense_inputs.astype(compute_dtype)]
    F = sum(p.shape[1] for p in parts)
    f_pad = _round_up(F, 128)
    if f_pad > F:
        parts.append(jnp.zeros((x.shape[0], f_pad - F), compute_dtype))
    x_feat = jnp.concatenate(parts, axis=-1)             # (B, f_pad) compute dtype

    return fm_forward(x_feat, params["w0"], params["w1"], params["w2"],
                      compute_dtype=compute_dtype, block_b=block_b,
                      square_in_f32=square_in_f32)


def init_params(key, n_dense, sparse_feature_cols):
    n_sparse = len(sparse_feature_cols)
    embed_dim = sparse_feature_cols[0]["embed_dim"]
    fea_num = n_dense + n_sparse * embed_dim

    keys = jax.random.split(key, n_sparse + 2)
    # nn.Embedding default init: N(0, 1)
    embed = [
        jax.random.normal(keys[i], (feat["feat_num"], feat["embed_dim"]), jnp.float32)
        for i, feat in enumerate(sparse_feature_cols)
    ]
    w0 = jnp.zeros((1,), jnp.float32)
    # torch.rand -> uniform [0, 1)
    w1 = jax.random.uniform(keys[n_sparse], (fea_num, 1), jnp.float32)
    w2 = jax.random.uniform(keys[n_sparse + 1], (fea_num, embed_dim), jnp.float32)
    return {"embed": embed, "w0": w0, "w1": w1, "w2": w2, "n_dense": n_dense}


def _build_x_feat_f32(params, x):
    """Plain-JAX reference feature build (f32), mirroring the torch module."""
    n_dense = params["n_dense"]
    dense_inputs = x[:, :n_dense]
    sparse_inputs = x[:, n_dense:].astype(jnp.int32)
    embeds = [
        jnp.take(params["embed"][i], sparse_inputs[:, i], axis=0)
        for i in range(sparse_inputs.shape[1])
    ]
    return jnp.concatenate(embeds + [dense_inputs], axis=-1).astype(jnp.float32)


def _ref_f32(params, x):
    """Exact f32 reference matching the torch module math."""
    x_feat = _build_x_feat_f32(params, x)
    w0, w1, w2 = params["w0"], params["w1"], params["w2"]
    hi = jax.lax.Precision.HIGHEST
    first = w0 + jnp.dot(x_feat, w1, precision=hi)
    second = 0.5 * jnp.sum(
        jnp.dot(x_feat, w2, precision=hi) ** 2
        - jnp.dot(x_feat * x_feat, w2 * w2, precision=hi),
        axis=1, keepdims=True,
    )
    return jax.nn.sigmoid(first + second)[:, 0]


def _ref_bf16(params, x):
    """Reference matching the bf16-quantized kernel path (f32 accumulation)."""
    x_feat = _build_x_feat_f32(params, x)
    w0, w1, w2 = params["w0"], params["w1"], params["w2"]
    hi = jax.lax.Precision.HIGHEST

    def q(a):
        return a.astype(jnp.bfloat16).astype(jnp.float32)

    xb, w1b, w2b = q(x_feat), q(w1), q(w2)
    vb = q(jnp.sum(w2 * w2, axis=1, keepdims=True))
    x2b = q(xb * xb)
    first = w0 + jnp.dot(xb, w1b, precision=hi)
    second = 0.5 * (
        jnp.sum(jnp.dot(xb, w2b, precision=hi) ** 2, axis=1, keepdims=True)
        - jnp.dot(x2b, vb, precision=hi)
    )
    return jax.nn.sigmoid(first + second)[:, 0]


def _make_inputs(key, B, n_dense, sparse_feature_cols):
    k_dense, k_sparse = jax.random.split(key)
    dense = jax.random.normal(k_dense, (B, n_dense), jnp.float32)
    sparse_idx = jnp.stack(
        [
            jax.random.randint(jax.random.fold_in(k_sparse, i), (B,), 0,
                               feat["feat_num"])
            for i, feat in enumerate(sparse_feature_cols)
        ],
        axis=1,
    ).astype(jnp.float32)
    return jnp.concatenate([dense, sparse_idx], axis=1)


if __name__ == "__main__":
    key = jax.random.PRNGKey(0)
    k_param, k_in1, k_in2 = jax.random.split(key, 3)

    # small synthetic feature columns
    n_dense = 4
    sparse_feature_cols = [
        {"feat_num": 10, "embed_dim": 8},
        {"feat_num": 12, "embed_dim": 8},
        {"feat_num": 16, "embed_dim": 8},
    ]
    params = init_params(k_param, n_dense, sparse_feature_cols)

    # ---------------- tiny batch (B=2), single tile -------------------------
    B = 2
    x = _make_inputs(k_in1, B, n_dense, sparse_feature_cols)

    out_bf16 = fm_apply(params, x)                                  # perf path
    out_f32 = fm_apply(params, x, compute_dtype=jnp.float32)        # exact path
    jax.block_until_ready((out_bf16, out_f32))
    assert out_bf16.shape == (B,) and out_f32.shape == (B,)

    ref32 = _ref_f32(params, x)
    refb16 = _ref_bf16(params, x)
    assert jnp.allclose(out_f32, ref32, atol=2e-3, rtol=2e-3), (
        float(jnp.max(jnp.abs(out_f32 - ref32))))
    assert jnp.allclose(out_bf16, refb16, atol=2e-3, rtol=2e-3), (
        float(jnp.max(jnp.abs(out_bf16 - refb16))))

    # ---------------- multi-tile check (B=37, block_b=16 -> 3 grid steps) ---
    B2 = 37
    x2 = _make_inputs(k_in2, B2, n_dense, sparse_feature_cols)

    out2_bf16 = fm_apply(params, x2, block_b=16)
    out2_f32 = fm_apply(params, x2, compute_dtype=jnp.float32, block_b=16)
    jax.block_until_ready((out2_bf16, out2_f32))
    assert out2_bf16.shape == (B2,) and out2_f32.shape == (B2,)

    ref2_32 = _ref_f32(params, x2)
    ref2_b16 = _ref_bf16(params, x2)
    assert jnp.allclose(out2_f32, ref2_32, atol=2e-3, rtol=2e-3), (
        float(jnp.max(jnp.abs(out2_f32 - ref2_32))))
    assert jnp.allclose(out2_bf16, ref2_b16, atol=2e-3, rtol=2e-3), (
        float(jnp.max(jnp.abs(out2_bf16 - ref2_b16))))

    print("KERNEL_OK")
</pallas_src>

<mosaic_0001>
module attributes {stable_mosaic.version = 11 : i64} {
  func.func @fm_kernel(%arg0: i32, %arg1: memref<1xf32, #tpu.memory_space<smem>>, %arg2: memref<16x128xbf16, #tpu.memory_space<vmem>>, %arg3: memref<128x9xbf16, #tpu.memory_space<vmem>>, %arg4: memref<128x1xbf16, #tpu.memory_space<vmem>>, %arg5: memref<16x1xf32, #tpu.memory_space<vmem>>) attributes {dimension_semantics = [#tpu.dimension_semantics<parallel>], iteration_bounds = array<i64: 1>, scalar_prefetch = 0 : i64, scratch_operands = 0 : i64, tpu.core_type = #tpu.core_type<tc>, window_params = [{transform_indices = @transform_0, window_bounds = array<i64: 1>}, {transform_indices = @transform_1, window_bounds = array<i64: 16, 128>}, {pipeline_mode = #tpu.pipeline_mode<synchronous>, transform_indices = @transform_2, window_bounds = array<i64: 128, 9>}, {pipeline_mode = #tpu.pipeline_mode<synchronous>, transform_indices = @transform_3, window_bounds = array<i64: 128, 1>}, {transform_indices = @transform_4, window_bounds = array<i64: 16, 1>}]} {
    %c0 = arith.constant 0 : index
    %c0_0 = arith.constant 0 : index
    %0 = vector.load %arg2[%c0, %c0_0] : memref<16x128xbf16, #tpu.memory_space<vmem>>, vector<16x128xbf16>
    %c0_1 = arith.constant 0 : index
    %c0_2 = arith.constant 0 : index
    %1 = vector.load %arg3[%c0_1, %c0_2] : memref<128x9xbf16, #tpu.memory_space<vmem>>, vector<128x9xbf16>
    %cst = arith.constant dense<0.000000e+00> : vector<16x9xf32>
    %2 = tpu.matmul %0, %1, %cst {dimension_numbers = #tpu.dot_dimension_numbers<[1], [0], [0], [1], [0, 0, 1, 1], [], []>} : vector<16x128xbf16>, vector<128x9xbf16>, vector<16x9xf32> -> vector<16x9xf32>
    %3 = vector.extract_strided_slice %2 {offsets = [0, 0], sizes = [16, 8], strides = [1, 1]} : vector<16x9xf32> to vector<16x8xf32>
    %c0_3 = arith.constant 0 : index
    %4 = memref.load %arg1[%c0_3] : memref<1xf32, #tpu.memory_space<smem>>
    %5 = vector.extract_strided_slice %2 {offsets = [0, 8], sizes = [16, 1], strides = [1, 1]} : vector<16x9xf32> to vector<16x1xf32>
    %6 = vector.broadcast %4 : f32 to vector<16x1xf32>
    %7 = arith.addf %6, %5 : vector<16x1xf32>
    %8 = arith.extf %0 : vector<16x128xbf16> to vector<16x128xf32>
    %9 = arith.mulf %8, %8 : vector<16x128xf32>
    %10 = arith.truncf %9 : vector<16x128xf32> to vector<16x128xbf16>
    %c0_4 = arith.constant 0 : index
    %c0_5 = arith.constant 0 : index
    %11 = vector.load %arg4[%c0_4, %c0_5] : memref<128x1xbf16, #tpu.memory_space<vmem>>, vector<128x1xbf16>
    %cst_6 = arith.constant dense<0.000000e+00> : vector<16x1xf32>
    %12 = tpu.matmul %10, %11, %cst_6 {dimension_numbers = #tpu.dot_dimension_numbers<[1], [0], [0], [1], [0, 0, 1, 1], [], []>} : vector<16x128xbf16>, vector<128x1xbf16>, vector<16x1xf32> -> vector<16x1xf32>
    %13 = arith.mulf %3, %3 : vector<16x8xf32>
    %cst_7 = arith.constant dense<0.000000e+00> : vector<16xf32>
    %14 = vector.multi_reduction <add>, %13, %cst_7 [1] : vector<16x8xf32> to vector<16xf32>
    %15 = vector.shape_cast %14 : vector<16xf32> to vector<16x1xf32>
    %16 = arith.subf %15, %12 : vector<16x1xf32>
    %cst_8 = arith.constant 5.000000e-01 : f32
    %17 = vector.broadcast %cst_8 : f32 to vector<16x1xf32>
    %18 = arith.mulf %17, %16 : vector<16x1xf32>
    %19 = arith.addf %7, %18 : vector<16x1xf32>
    %20 = arith.negf %19 : vector<16x1xf32>
    %21 = math.exp %20 : vector<16x1xf32>
    %cst_9 = arith.constant 1.000000e+00 : f32
    %22 = vector.broadcast %cst_9 : f32 to vector<16x1xf32>
    %23 = arith.addf %22, %21 : vector<16x1xf32>
    %24 = arith.divf %22, %23 : vector<16x1xf32>
    %c0_10 = arith.constant 0 : index
    %c0_11 = arith.constant 0 : index
    %25 = vector.load %arg5[%c0_10, %c0_11] : memref<16x1xf32, #tpu.memory_space<vmem>>, vector<16x1xf32>
    tpu.vector_store %arg5[%c0_10, %c0_11], %24 {strides = array<i32>} : memref<16x1xf32, #tpu.memory_space<vmem>>, vector<16x1xf32>,
    return
  }
  func.func @transform_0(%arg0: i32) -> i32 {
    %c0_i32 = arith.constant 0 : i32
    %c0_i32_0 = arith.constant 0 : i32
    return %c0_i32 : i32
  }
  func.func @transform_1(%arg0: i32) -> (i32, i32) {
    %c0_i32 = arith.constant 0 : i32
    %c0_i32_0 = arith.constant 0 : i32
    return %arg0, %c0_i32 : i32, i32
  }
  func.func @transform_2(%arg0: i32) -> (i32, i32) {
    %c0_i32 = arith.constant 0 : i32
    %c0_i32_0 = arith.constant 0 : i32
    %c0_i32_1 = arith.constant 0 : i32
    return %c0_i32, %c0_i32_0 : i32, i32
  }
  func.func @transform_3(%arg0: i32) -> (i32, i32) {
    %c0_i32 = arith.constant 0 : i32
    %c0_i32_0 = arith.constant 0 : i32
    %c0_i32_1 = arith.constant 0 : i32
    return %c0_i32, %c0_i32_0 : i32, i32
  }
  func.func @transform_4(%arg0: i32) -> (i32, i32) {
    %c0_i32 = arith.constant 0 : i32
    %c0_i32_0 = arith.constant 0 : i32
    return %arg0, %c0_i32 : i32, i32
  }
}

</mosaic_0001>

<llo_original>
// kernel: tpu_custom_call.1
$region0: #{tpu_custom_call.1}
  #allocation0 [shape = 'u32[]', space=smem, size = 0x4, offset = 0x4, fixed_abs, tag = 'smem constant byte address 0x4 - core index']
  #allocation1 [shape = 'u32[144,128]{1,0:T(1,128)}', space=vmem, size = 0x12000, scoped, tag = 'internal scratch']
  #allocation2 [shape = 'f32[1]{0:T(128)S(6)}', space=smem, size = 0x200, scoped, tag = 'scoped memory for tpu_custom_call.1']
  %s0 = inlined_call_operand.<no memory space> [shape: f32[1], index: 0, kind: input, shape index: {}]
  %s1 = inlined_call_operand.vmem [shape: bf16[16,128], index: 1, kind: input, shape index: {}]
  %s2 = inlined_call_operand.vmem [shape: bf16[128,9], index: 2, kind: input, shape index: {}]
  %s3 = inlined_call_operand.vmem [shape: bf16[128,1], index: 3, kind: input, shape index: {}]
  %s4 = inlined_call_operand.vmem [shape: f32[16,1], index: 4, kind: output, shape index: {}]
  %s5 = sld [smem:[#allocation0]]
  $region26: #{tpu_custom_call.1} parent=0
    _
  %s7 = ssub.s32 1, %s5
  %s8 = scalar_select 0, %s7, %s5
  %9 = sst [smem:[#allocation2]] %s0
  // Predicated region
  $region2: #{tpu_custom_call.1} parent=0 // pred_check
    _
  $region3: #{tpu_custom_call.1} parent=0 // pred_check_branch
    %11 = sbr.rel (0) target = $region5
  $region4: #{tpu_custom_call.1} parent=0 // pred_region
    _
  $region5: #{tpu_custom_call.1} parent=0 // pred_fallthru
    _
  // Predicated region
  $region6: #{tpu_custom_call.1} parent=0 // pred_check
    _
  $region7: #{tpu_custom_call.1} parent=0 // pred_check_branch
    %13 = sbr.rel (0) target = $region9
  $region8: #{tpu_custom_call.1} parent=0 // pred_region
    _
  $region9: #{tpu_custom_call.1} parent=0 // pred_fallthru
    _
  // Predicated region
  $region10: #{tpu_custom_call.1} parent=0 // pred_check
    _
  $region11: #{tpu_custom_call.1} parent=0 // pred_check_branch
    %15 = sbr.rel (0) target = $region13
  $region12: #{tpu_custom_call.1} parent=0 // pred_region
    _
  $region13: #{tpu_custom_call.1} parent=0 // pred_fallthru
    _
  // Predicated region
  $region14: #{tpu_custom_call.1} parent=0 // pred_check
    _
  $region15: #{tpu_custom_call.1} parent=0 // pred_check_branch
    %17 = sbr.rel (0) target = $region17
  $region16: #{tpu_custom_call.1} parent=0 // pred_region
    _
  $region17: #{tpu_custom_call.1} parent=0 // pred_fallthru
    _
  %v19 = vld [vmem:[%s1] sm:$0xf]
  %v20 = vld [vmem:[%s1 + $0x4] sm:$0xf]
  %v21 = vld [vmem:[%s2] sm:$0xf]
  %v22 = vld [vmem:[%s2 + $0x4] sm:$0xf]
  %v23 = vld [vmem:[%s2 + $0x8] sm:$0xf]
  %v24 = vld [vmem:[%s2 + $0xc] sm:$0xf]
  %v25 = vld [vmem:[%s2 + $0x10] sm:$0xf]
  %v26 = vld [vmem:[%s2 + $0x14] sm:$0xf]
  %v27 = vld [vmem:[%s2 + $0x18] sm:$0xf]
  %v28 = vld [vmem:[%s2 + $0x1c] sm:$0xf]
  %v29 = vld [vmem:[%s2 + $0x20] sm:$0xf]
  %v30 = vld [vmem:[%s2 + $0x24] sm:$0xf]
  %v31 = vld [vmem:[%s2 + $0x28] sm:$0xf]
  %v32 = vld [vmem:[%s2 + $0x2c] sm:$0xf]
  %v33 = vld [vmem:[%s2 + $0x30] sm:$0xf]
  %v34 = vld [vmem:[%s2 + $0x34] sm:$0xf]
  %v35 = vld [vmem:[%s2 + $0x38] sm:$0xf]
  %v36 = vld [vmem:[%s2 + $0x3c] sm:$0xf]
  %v39 = vunpack.c.l.b16 %v19
  %v40 = vunpack.c.l.b16 %v20
  %v41 = vpack.c.b16 %v40, %v39
  %v59 = vunpack.c.l.b16 %v21
  %v60 = vunpack.c.l.b16 %v22
  %v61 = vunpack.c.l.b16 %v23
  %v62 = vunpack.c.l.b16 %v24
  %v63 = vunpack.c.l.b16 %v25
  %v64 = vunpack.c.l.b16 %v26
  %v65 = vunpack.c.l.b16 %v27
  %v66 = vunpack.c.l.b16 %v28
  %v67 = vunpack.c.l.b16 %v29
  %v68 = vunpack.c.l.b16 %v30
  %v69 = vunpack.c.l.b16 %v31
  %v70 = vunpack.c.l.b16 %v32
  %v71 = vunpack.c.l.b16 %v33
  %v72 = vunpack.c.l.b16 %v34
  %v73 = vunpack.c.l.b16 %v35
  %v74 = vunpack.c.l.b16 %v36
  %v75 = vpack.c.b16 %v60, %v59
  %v76 = vpack.c.b16 %v62, %v61
  %v77 = vpack.c.b16 %v64, %v63
  %v78 = vpack.c.b16 %v66, %v65
  %v79 = vpack.c.b16 %v68, %v67
  %v80 = vpack.c.b16 %v70, %v69
  %v81 = vpack.c.b16 %v72, %v71
  %v82 = vpack.c.b16 %v74, %v73
  %91 = vmatprep.subr.bf16.mxu0 0
  %92 = vmatpush1.bf16.msra.mxu0 %v75
  %93 = vmatprep.subr.bf16.mxu0 0
  %94 = vmatpush1.bf16.msra.mxu0 %v76
  %95 = vmatprep.subr.bf16.mxu0 0
  %96 = vmatpush1.bf16.msra.mxu0 %v77
  %97 = vmatprep.subr.bf16.mxu0 0
  %98 = vmatpush1.bf16.msra.mxu0 %v78
  %99 = vmatprep.subr.bf16.mxu0 0
  %100 = vmatpush1.bf16.msra.mxu0 %v79
  %101 = vmatprep.subr.bf16.mxu0 0
  %102 = vmatpush1.bf16.msra.mxu0 %v80
  %103 = vmatprep.subr.bf16.mxu0 0
  %104 = vmatpush1.bf16.msra.mxu0 %v81
  %105 = vmatprep.subr.bf16.mxu0 0
  %106 = vmatpush1.bf16.msra.mxu0 %v82
  %107 = vmatprep.subr.bf16.mxu0 0
  %108 = vmatpush1.bf16.msra.mxu0 0
  %109 = vmatprep.subr.bf16.mxu0 0
  %110 = vmatpush1.bf16.msra.mxu0 0
  %111 = vmatprep.subr.bf16.mxu0 0
  %112 = vmatpush1.bf16.msra.mxu0 0
  %113 = vmatprep.subr.bf16.mxu0 0
  %114 = vmatpush1.bf16.msra.mxu0 0
  %115 = vmatprep.subr.bf16.mxu0 0
  %116 = vmatpush1.bf16.msra.mxu0 0
  %117 = vmatprep.subr.bf16.mxu0 0
  %118 = vmatpush1.bf16.msra.mxu0 0
  %119 = vmatprep.subr.bf16.mxu0 0
  %120 = vmatpush1.bf16.msra.mxu0 0
  %121 = vmatprep.subr.bf16.mxu0 0
  %122 = vmatpush1.bf16.msra.mxu0 0
  %123 = vmatprep.mubr.bf16.mxu0 0
  %124 = vmatmul.mubr.bf16.gmra.mrb[0].mxu0 %v41
  %v125 = vpop.f32.mrb[0].mxu0
  %v126 = vadd.f32 0.0, %v125
  %v127 = vpop.f32.mrb[0].mxu0
  %v128 = vpop.f32.mrb[0].mxu0
  %v129 = vadd.f32 0.0, %v128
  %v130 = vpop.f32.mrb[0].mxu0
  %131 = vdwg.mxu0
  %s132 = sld [smem:[#allocation2]]
  %v133 = vstv %s132
  %v134 = vadd.f32 %v133, %v126
  %v135 = vadd.f32 %v133, %v129
  %v136 = vunpack.c.l.bf16 %v19
  %v137 = vunpack.c.l.bf16 %v20
  %v138 = vmul.f32 %v136, %v136
  %v139 = vmul.f32 %v137, %v137
  %v140 = vpack.c.bf16 %v139, %v138
  %v141 = vld [vmem:[%s3] sm:$0xf]
  %v142 = vld [vmem:[%s3 + $0x4] sm:$0xf]
  %v143 = vld [vmem:[%s3 + $0x8] sm:$0xf]
  %v144 = vld [vmem:[%s3 + $0xc] sm:$0xf]
  %v145 = vld [vmem:[%s3 + $0x10] sm:$0xf]
  %v146 = vld [vmem:[%s3 + $0x14] sm:$0xf]
  %v147 = vld [vmem:[%s3 + $0x18] sm:$0xf]
  %v148 = vld [vmem:[%s3 + $0x1c] sm:$0xf]
  %v149 = vld [vmem:[%s3 + $0x20] sm:$0xf]
  %v150 = vld [vmem:[%s3 + $0x24] sm:$0xf]
  %v151 = vld [vmem:[%s3 + $0x28] sm:$0xf]
  %v152 = vld [vmem:[%s3 + $0x2c] sm:$0xf]
  %v153 = vld [vmem:[%s3 + $0x30] sm:$0xf]
  %v154 = vld [vmem:[%s3 + $0x34] sm:$0xf]
  %v155 = vld [vmem:[%s3 + $0x38] sm:$0xf]
  %v156 = vld [vmem:[%s3 + $0x3c] sm:$0xf]
  %v173 = vunpack.c.l.b16 %v141
  %v174 = vunpack.c.l.b16 %v142
  %v175 = vunpack.c.l.b16 %v143
  %v176 = vunpack.c.l.b16 %v144
  %v177 = vunpack.c.l.b16 %v145
  %v178 = vunpack.c.l.b16 %v146
  %v179 = vunpack.c.l.b16 %v147
  %v180 = vunpack.c.l.b16 %v148
  %v181 = vunpack.c.l.b16 %v149
  %v182 = vunpack.c.l.b16 %v150
  %v183 = vunpack.c.l.b16 %v151
  %v184 = vunpack.c.l.b16 %v152
  %v185 = vunpack.c.l.b16 %v153
  %v186 = vunpack.c.l.b16 %v154
  %v187 = vunpack.c.l.b16 %v155
  %v188 = vunpack.c.l.b16 %v156
  %v189 = vpack.c.b16 %v174, %v173
  %v190 = vpack.c.b16 %v176, %v175
  %v191 = vpack.c.b16 %v178, %v177
  %v192 = vpack.c.b16 %v180, %v179
  %v193 = vpack.c.b16 %v182, %v181
  %v194 = vpack.c.b16 %v184, %v183
  %v195 = vpack.c.b16 %v186, %v185
  %v196 = vpack.c.b16 %v188, %v187
  %205 = vmatprep.subr.bf16.mxu0 0
  %206 = vmatpush1.bf16.msra.mxu0 %v189
  %207 = vmatprep.subr.bf16.mxu0 0
  %208 = vmatpush1.bf16.msra.mxu0 %v190
  %209 = vmatprep.subr.bf16.mxu0 0
  %210 = vmatpush1.bf16.msra.mxu0 %v191
  %211 = vmatprep.subr.bf16.mxu0 0
  %212 = vmatpush1.bf16.msra.mxu0 %v192
  %213 = vmatprep.subr.bf16.mxu0 0
  %214 = vmatpush1.bf16.msra.mxu0 %v193
  %215 = vmatprep.subr.bf16.mxu0 0
  %216 = vmatpush1.bf16.msra.mxu0 %v194
  %217 = vmatprep.subr.bf16.mxu0 0
  %218 = vmatpush1.bf16.msra.mxu0 %v195
  %219 = vmatprep.subr.bf16.mxu0 0
  %220 = vmatpush1.bf16.msra.mxu0 %v196
  %221 = vmatprep.subr.bf16.mxu0 0
  %222 = vmatpush1.bf16.msra.mxu0 0
  %223 = vmatprep.subr.bf16.mxu0 0
  %224 = vmatpush1.bf16.msra.mxu0 0
  %225 = vmatprep.subr.bf16.mxu0 0
  %226 = vmatpush1.bf16.msra.mxu0 0
  %227 = vmatprep.subr.bf16.mxu0 0
  %228 = vmatpush1.bf16.msra.mxu0 0
  %229 = vmatprep.subr.bf16.mxu0 0
  %230 = vmatpush1.bf16.msra.mxu0 0
  %231 = vmatprep.subr.bf16.mxu0 0
  %232 = vmatpush1.bf16.msra.mxu0 0
  %233 = vmatprep.subr.bf16.mxu0 0
  %234 = vmatpush1.bf16.msra.mxu0 0
  %235 = vmatprep.subr.bf16.mxu0 0
  %236 = vmatpush1.bf16.msra.mxu0 0
  %237 = vmatprep.mubr.bf16.mxu0 0
  %238 = vmatmul.mubr.bf16.gmra.mrb[0].mxu0 %v140
  %v239 = vpop.f32.mrb[0].mxu0
  %v240 = vadd.f32 0.0, %v239
  %v241 = vpop.f32.mrb[0].mxu0
  %v242 = vpop.f32.mrb[0].mxu0
  %v243 = vadd.f32 0.0, %v242
  %v244 = vpop.f32.mrb[0].mxu0
  %245 = vdwg.mxu0
  %v246 = vmul.f32 %v126, %v126
  %v247 = vmul.f32 %v129, %v129
  %vm248 = vcmask 64512
  %v249 = vsel %vm248, %v246, 0.0
  %250 = vadd.xlane.f32.xlu0 %v249
  %v251 = vpop.xlane.xlu0 %250
  %v252 = vsel %vm248, %v247, 0.0
  %253 = vadd.xlane.f32.xlu0 %v252
  %v254 = vpop.xlane.xlu0 %253
  %v255 = vsub.f32 %v251, %v240
  %v256 = vsub.f32 %v254, %v243
  %v257 = vmul.f32 %v255, 0.5
  %v258 = vmul.f32 %v256, 0.5
  %261 = vrot.lane.b32.xlu0 %v257, 8
  %v262 = vpop.permute.xlu0 %261
  %263 = vrot.lane.b32.xlu0 %v258, 8
  %v264 = vpop.permute.xlu0 %263
  %v267 = vadd.f32 %v134, %v262
  %v268 = vadd.f32 %v135, %v264
  %v269 = vxor.u32 %v267, 2147483648
  %v270 = vxor.u32 %v268, 2147483648
  %v271 = vmul.f32 %v269, 1.442695
  %v272 = vpow.pop %v271
  %v273 = vmul.f32 %v270, 1.442695
  %v274 = vpow.pop %v273
  %v275 = vadd.f32 %v272, 1.0
  %v276 = vadd.f32 %v274, 1.0
  %v277 = vrcp.pop %v275
  %v278 = vmul.f32 1.0, %v277
  %v279 = vrcp.pop %v276
  %v280 = vmul.f32 1.0, %v279
  %283 = vrot.lane.b32.xlu0 %v278, 120
  %v284 = vpop.permute.xlu0 %283
  %285 = vrot.lane.b32.xlu0 %v280, 120
  %v286 = vpop.permute.xlu0 %285
  %vm289 = vcmask 7168
  %290 = vst.msk [vmem:[%s4] sm:$0xff] %vm289, %v284
  %291 = vst.msk [vmem:[%s4 + $0x8] sm:$0xff] %vm289, %v286
  // Predicated region
  $region18: #{tpu_custom_call.1} parent=0 // pred_check
    _
  $region19: #{tpu_custom_call.1} parent=0 // pred_check_branch
    %293 = sbr.rel (0) target = $region21
  $region20: #{tpu_custom_call.1} parent=0 // pred_region
    _
  $region21: #{tpu_custom_call.1} parent=0 // pred_fallthru
    _
  // Predicated region
  $region22: #{tpu_custom_call.1} parent=0 // pred_check
    _
  $region23: #{tpu_custom_call.1} parent=0 // pred_check_branch
    %295 = sbr.rel (0) target = $region25
  $region24: #{tpu_custom_call.1} parent=0 // pred_region
    _
  $region25: #{tpu_custom_call.1} parent=0 // pred_fallthru
    _

</llo_original>
